<compile_context>
chip_gen: v5e
topology: v5e:2x2
jax: 0.10.0
libtpu: 0.0.40
codegen_flags: <defaults>
</compile_context>

<pallas_src>
import math
import numpy as np
import jax
import jax.numpy as jnp
from jax.experimental import pallas as pl
from jax.experimental.pallas import tpu as pltpu


# ----------------------------------------------------------------------------
# Kernels
# ----------------------------------------------------------------------------
def cnn_embed_kernel(x_ref, m1_ref, b1_ref, m2_ref, b2_ref, o_ref):
    # Conv1d(1->8,k=3,p=1)+ReLU + Conv1d(8->32,k=3,p=1)+ReLU as Toeplitz matmuls.
    x = x_ref[...]                                                     # (R, P)
    h1 = jnp.dot(x, m1_ref[...], preferred_element_type=jnp.float32)   # (R, 8P) f32
    h1 = jnp.maximum(h1 + b1_ref[...], 0.0)
    h1 = h1.astype(m2_ref.dtype)                                       # bf16 for MXU
    h2 = jnp.dot(h1, m2_ref[...], preferred_element_type=jnp.float32)  # (R, 32P) f32
    o_ref[...] = jnp.maximum(h2 + b2_ref[...], 0.0)


def linear_embed_kernel(x_ref, w_ref, b_ref, gm_ref, gamma_ref, beta_ref, o_ref):
    # Linear + LayerNorm on `g` patches packed per row (block-diagonal weight).
    # gm_ref is the block-diagonal group-mean matrix: (y @ gm) broadcasts each
    # embedding-group mean back over its own emb lanes (no cross-lane relayout).
    y = jnp.dot(x_ref[...], w_ref[...], preferred_element_type=jnp.float32)
    y = y + b_ref[...]                                                 # (R, g*emb) f32
    mean = jnp.dot(y, gm_ref[...], preferred_element_type=jnp.float32)
    d = y - mean
    var = jnp.dot(d * d, gm_ref[...], preferred_element_type=jnp.float32)
    yhat = d * jax.lax.rsqrt(var + 1e-5)                               # LN eps = 1e-5
    o_ref[...] = yhat * gamma_ref[...] + beta_ref[...]


# ----------------------------------------------------------------------------
# Glue: parameter transforms (deterministic, wrapper-side)
# ----------------------------------------------------------------------------
def _conv1d_toeplitz(w, p):
    """Banded Toeplitz M s.t. x_flat @ M == Conv1d(k, padding=k//2)(x) (PyTorch NCW).

    x_flat[n, i*p + t] = x[n, i, t];  out_flat[n, o*p + t] = conv(x)[n, o, t]
    (channel-major flatten, matching rearrange '(e p)').
    """
    w = jnp.asarray(w, jnp.float32)                         # (cout, cin, K)
    cout, cin, K = w.shape
    pad = K // 2
    # shifts[k, tp, t] = 1 iff tp == t + (k - pad)   (out[t] reads in[t + k - pad])
    shifts = np.stack([np.eye(p, k=pad - k, dtype=np.float32) for k in range(K)])
    blocks = jnp.einsum('oik,kab->iaob', w, jnp.asarray(shifts))
    return blocks.reshape(cin * p, cout * p)


def _row_bias(b, p):
    return jnp.repeat(jnp.asarray(b, jnp.float32), p)[None, :]


def _round_up(x, m):
    return -(-int(x) // m) * m


def _choose_block(n, target, multiple):
    """Largest block <= target (rounded to `multiple`), but never bigger than n
    rounded up to `multiple` (avoids padding tiny inputs to a huge block)."""
    target = max(multiple, (int(target) // multiple) * multiple)
    return target if n >= target else _round_up(n, multiple)


# ----------------------------------------------------------------------------
# Wrappers (pallas_call)
# ----------------------------------------------------------------------------
def embedding_cnn_forward(x, w1, b1, w2, b2, *, block_rows=1024, use_bf16=True):
    b, c, s, p = x.shape
    n = b * c * s
    c1, c2 = int(w1.shape[0]), int(w2.shape[0])             # 8, 32
    cdt = jnp.bfloat16 if use_bf16 else jnp.float32

    xf = x.astype(jnp.float32).reshape(n, p)                # 'b c s p -> (b c s) p'
    rb = _choose_block(n, block_rows, 8)
    n_pad = _round_up(n, rb)
    if n_pad != n:
        xf = jnp.pad(xf, ((0, n_pad - n), (0, 0)))
    xf = xf.astype(cdt)

    m1 = _conv1d_toeplitz(w1, p).astype(cdt)                # (p,    c1*p)
    m2 = _conv1d_toeplitz(w2, p).astype(cdt)                # (c1*p, c2*p)
    b1r = _row_bias(b1, p)                                  # (1, c1*p) f32
    b2r = _row_bias(b2, p)                                  # (1, c2*p) f32

    out = pl.pallas_call(
        cnn_embed_kernel,
        out_shape=jax.ShapeDtypeStruct((n_pad, c2 * p), jnp.float32),
        grid_spec=pl.GridSpec(
            grid=(n_pad // rb,),
            in_specs=[
                pl.BlockSpec((rb, p), lambda i: (i, 0)),
                pl.BlockSpec((p, c1 * p), lambda i: (0, 0)),
                pl.BlockSpec((1, c1 * p), lambda i: (0, 0)),
                pl.BlockSpec((c1 * p, c2 * p), lambda i: (0, 0)),
                pl.BlockSpec((1, c2 * p), lambda i: (0, 0)),
            ],
            out_specs=pl.BlockSpec((rb, c2 * p), lambda i: (i, 0)),
        ),
        compiler_params=pltpu.CompilerParams(dimension_semantics=("parallel",)),
    )(xf, m1, b1r, m2, b2r)
    return out[:n].reshape(b, c, s, c2 * p)                 # '(b c s) (e p) -> b c s (e p)'


def embedding_linear_forward(x, w, bias, gamma, beta, *,
                             block_rows_packed=512, use_bf16=True):
    *lead, in_dim = x.shape
    emb = int(w.shape[0])
    n = int(np.prod(lead))
    cdt = jnp.bfloat16 if use_bf16 else jnp.float32

    # Pack `g` patches per kernel row so the output last dim (g*emb) is a
    # multiple of 128 lanes -> unmasked, lane-dense output stores.
    g = 128 // math.gcd(emb, 128)
    lane_in, lane_out = g * in_dim, g * emb

    xf = x.astype(jnp.float32).reshape(n, in_dim)
    r_needed = -(-n // g)
    rb = _choose_block(r_needed, block_rows_packed, 8)
    r_pad = _round_up(r_needed, rb)
    n_pad = r_pad * g
    if n_pad != n:
        xf = jnp.pad(xf, ((0, n_pad - n), (0, 0)))
    xp = xf.reshape(r_pad, lane_in).astype(cdt)             # row-major: free reshape

    wt = jnp.asarray(w, jnp.float32).T                      # (in, emb)
    wblk = jnp.kron(jnp.eye(g, dtype=jnp.float32), wt).astype(cdt)      # (g*in, g*emb)
    gm = jnp.kron(jnp.eye(g, dtype=jnp.float32),
                  jnp.full((emb, emb), 1.0 / emb, jnp.float32))         # group-mean
    brow = jnp.tile(jnp.asarray(bias, jnp.float32), g)[None, :]
    grow = jnp.tile(jnp.asarray(gamma, jnp.float32), g)[None, :]
    berow = jnp.tile(jnp.asarray(beta, jnp.float32), g)[None, :]

    out = pl.pallas_call(
        linear_embed_kernel,
        out_shape=jax.ShapeDtypeStruct((r_pad, lane_out), jnp.float32),
        grid_spec=pl.GridSpec(
            grid=(r_pad // rb,),
            in_specs=[
                pl.BlockSpec((rb, lane_in), lambda i: (i, 0)),
                pl.BlockSpec((lane_in, lane_out), lambda i: (0, 0)),
                pl.BlockSpec((1, lane_out), lambda i: (0, 0)),
                pl.BlockSpec((lane_out, lane_out), lambda i: (0, 0)),
                pl.BlockSpec((1, lane_out), lambda i: (0, 0)),
                pl.BlockSpec((1, lane_out), lambda i: (0, 0)),
            ],
            out_specs=pl.BlockSpec((rb, lane_out), lambda i: (i, 0)),
        ),
        compiler_params=pltpu.CompilerParams(dimension_semantics=("parallel",)),
    )(xp, wblk, brow, gm, grow, berow)
    out = out.reshape(n_pad, emb)[:n]
    return out.reshape(*lead, emb)


# ----------------------------------------------------------------------------
# Pure-JAX references (PyTorch semantics) for verification
# ----------------------------------------------------------------------------
def _conv1d_ref(x, w, b):                                    # x: (N, Cin, L), padding=1
    L = x.shape[-1]
    xp = jnp.pad(x, ((0, 0), (0, 0), (1, 1)))
    out = b[None, :, None].astype(jnp.float32)
    for k in range(w.shape[-1]):
        out = out + jnp.einsum('nil,oi->nol', xp[:, :, k:k + L], w[:, :, k])
    return out


def cnn_ref(x, w1, b1, w2, b2):
    b, c, s, p = x.shape
    xr = x.astype(jnp.float32).reshape(b * c * s, 1, p)
    h1 = jax.nn.relu(_conv1d_ref(xr, w1, b1))
    h2 = jax.nn.relu(_conv1d_ref(h1, w2, b2))
    return h2.reshape(b, c, s, w2.shape[0] * p)


def linear_ref(x, w, bias, gamma, beta):
    y = x.astype(jnp.float32) @ w.T + bias
    mean = y.mean(-1, keepdims=True)
    var = ((y - mean) ** 2).mean(-1, keepdims=True)
    return (y - mean) / jnp.sqrt(var + 1e-5) * gamma + beta


# ----------------------------------------------------------------------------
if __name__ == "__main__":
    key = jax.random.PRNGKey(0)
    kx, k1, k2, k3, k4, k5, k6 = jax.random.split(key, 7)

    B, C, S, P = 2, 4, 8, 16          # batch, channels, seq_len, patch_len (= input_size)
    EMB = 32                          # embedding_dim for mode='linear'

    x = jax.random.normal(kx, (B, C, S, P), jnp.float32)

    # mode='cnn' params: Conv1d(1->8,3,pad=1), Conv1d(8->32,3,pad=1)
    w1 = jax.random.normal(k1, (8, 1, 3), jnp.float32) * 0.3
    b1 = jax.random.normal(k2, (8,), jnp.float32) * 0.1
    w2 = jax.random.normal(k3, (32, 8, 3), jnp.float32) * 0.2
    b2 = jax.random.normal(k4, (32,), jnp.float32) * 0.1

    # mode='linear' params: Linear(P->EMB) + LayerNorm(EMB)
    wl = jax.random.normal(k5, (EMB, P), jnp.float32) * 0.2
    bl = jax.random.normal(k6, (EMB,), jnp.float32) * 0.1
    gamma = jnp.ones((EMB,), jnp.float32)
    beta = jnp.zeros((EMB,), jnp.float32)

    # f32 operand path: bit-level check of the math against the torch-semantics ref
    out_cnn_f32 = embedding_cnn_forward(x, w1, b1, w2, b2, use_bf16=False)
    out_lin_f32 = embedding_linear_forward(x, wl, bl, gamma, beta, use_bf16=False)
    # default perf path: bf16 matmul operands, f32 accumulation / elementwise tail
    out_cnn = embedding_cnn_forward(x, w1, b1, w2, b2)
    out_lin = embedding_linear_forward(x, wl, bl, gamma, beta)
    jax.block_until_ready((out_cnn, out_lin, out_cnn_f32, out_lin_f32))

    assert out_cnn.shape == (B, C, S, 32 * P) and out_cnn.dtype == jnp.float32
    assert out_lin.shape == (B, C, S, EMB) and out_lin.dtype == jnp.float32

    ref_cnn = np.asarray(cnn_ref(x, w1, b1, w2, b2))
    ref_lin = np.asarray(linear_ref(x, wl, bl, gamma, beta))

    np.testing.assert_allclose(np.asarray(out_cnn_f32), ref_cnn, rtol=1e-4, atol=1e-4)
    np.testing.assert_allclose(np.asarray(out_lin_f32), ref_lin, rtol=1e-4, atol=1e-4)
    np.testing.assert_allclose(np.asarray(out_cnn), ref_cnn, rtol=5e-2, atol=5e-2)
    np.testing.assert_allclose(np.asarray(out_lin), ref_lin, rtol=5e-2, atol=5e-2)
    print("KERNEL_OK")
</pallas_src>

<mosaic_0001>
module attributes {stable_mosaic.version = 11 : i64} {
  func.func @cnn_embed_kernel(%arg0: i32, %arg1: memref<64x16xf32, #tpu.memory_space<vmem>>, %arg2: memref<16x128xf32, #tpu.memory_space<vmem>>, %arg3: memref<1x128xf32, #tpu.memory_space<vmem>>, %arg4: memref<128x512xf32, #tpu.memory_space<vmem>>, %arg5: memref<1x512xf32, #tpu.memory_space<vmem>>, %arg6: memref<64x512xf32, #tpu.memory_space<vmem>>) attributes {dimension_semantics = [#tpu.dimension_semantics<parallel>], iteration_bounds = array<i64: 1>, scalar_prefetch = 0 : i64, scratch_operands = 0 : i64, tpu.core_type = #tpu.core_type<tc>, window_params = [{transform_indices = @transform_0, window_bounds = array<i64: 64, 16>}, {pipeline_mode = #tpu.pipeline_mode<synchronous>, transform_indices = @transform_1, window_bounds = array<i64: 16, 128>}, {pipeline_mode = #tpu.pipeline_mode<synchronous>, transform_indices = @transform_2, window_bounds = array<i64: 1, 128>}, {pipeline_mode = #tpu.pipeline_mode<synchronous>, transform_indices = @transform_3, window_bounds = array<i64: 128, 512>}, {pipeline_mode = #tpu.pipeline_mode<synchronous>, transform_indices = @transform_4, window_bounds = array<i64: 1, 512>}, {transform_indices = @transform_5, window_bounds = array<i64: 64, 512>}]} {
    %c0 = arith.constant 0 : index
    %c0_0 = arith.constant 0 : index
    %0 = vector.load %arg1[%c0, %c0_0] : memref<64x16xf32, #tpu.memory_space<vmem>>, vector<64x16xf32>
    %c0_1 = arith.constant 0 : index
    %c0_2 = arith.constant 0 : index
    %1 = vector.load %arg2[%c0_1, %c0_2] : memref<16x128xf32, #tpu.memory_space<vmem>>, vector<16x128xf32>
    %cst = arith.constant dense<0.000000e+00> : vector<64x128xf32>
    %2 = tpu.matmul %0, %1, %cst {dimension_numbers = #tpu.dot_dimension_numbers<[1], [0], [0], [1], [0, 0, 1, 1], [], []>} : vector<64x16xf32>, vector<16x128xf32>, vector<64x128xf32> -> vector<64x128xf32>
    %c0_3 = arith.constant 0 : index
    %c0_4 = arith.constant 0 : index
    %3 = vector.load %arg3[%c0_3, %c0_4] : memref<1x128xf32, #tpu.memory_space<vmem>>, vector<1x128xf32>
    %4 = vector.broadcast %3 : vector<1x128xf32> to vector<64x128xf32>
    %5 = arith.addf %2, %4 : vector<64x128xf32>
    %cst_5 = arith.constant 0.000000e+00 : f32
    %6 = vector.broadcast %cst_5 : f32 to vector<64x128xf32>
    %7 = arith.maximumf %5, %6 : vector<64x128xf32>
    %c0_6 = arith.constant 0 : index
    %c0_7 = arith.constant 0 : index
    %8 = vector.load %arg4[%c0_6, %c0_7] : memref<128x512xf32, #tpu.memory_space<vmem>>, vector<128x512xf32>
    %cst_8 = arith.constant dense<0.000000e+00> : vector<64x512xf32>
    %9 = tpu.matmul %7, %8, %cst_8 {dimension_numbers = #tpu.dot_dimension_numbers<[1], [0], [0], [1], [0, 0, 1, 1], [], []>} : vector<64x128xf32>, vector<128x512xf32>, vector<64x512xf32> -> vector<64x512xf32>
    %c0_9 = arith.constant 0 : index
    %c0_10 = arith.constant 0 : index
    %10 = vector.load %arg5[%c0_9, %c0_10] : memref<1x512xf32, #tpu.memory_space<vmem>>, vector<1x512xf32>
    %11 = vector.broadcast %10 : vector<1x512xf32> to vector<64x512xf32>
    %12 = arith.addf %9, %11 : vector<64x512xf32>
    %cst_11 = arith.constant 0.000000e+00 : f32
    %13 = vector.broadcast %cst_11 : f32 to vector<64x512xf32>
    %14 = arith.maximumf %12, %13 : vector<64x512xf32>
    %c0_12 = arith.constant 0 : index
    %c0_13 = arith.constant 0 : index
    %15 = vector.load %arg6[%c0_12, %c0_13] : memref<64x512xf32, #tpu.memory_space<vmem>>, vector<64x512xf32>
    tpu.vector_store %arg6[%c0_12, %c0_13], %14 {strides = array<i32>} : memref<64x512xf32, #tpu.memory_space<vmem>>, vector<64x512xf32>,
    return
  }
  func.func @transform_0(%arg0: i32) -> (i32, i32) {
    %c0_i32 = arith.constant 0 : i32
    %c0_i32_0 = arith.constant 0 : i32
    return %arg0, %c0_i32 : i32, i32
  }
  func.func @transform_1(%arg0: i32) -> (i32, i32) {
    %c0_i32 = arith.constant 0 : i32
    %c0_i32_0 = arith.constant 0 : i32
    %c0_i32_1 = arith.constant 0 : i32
    return %c0_i32, %c0_i32_0 : i32, i32
  }
  func.func @transform_2(%arg0: i32) -> (i32, i32) {
    %c0_i32 = arith.constant 0 : i32
    %c0_i32_0 = arith.constant 0 : i32
    %c0_i32_1 = arith.constant 0 : i32
    return %c0_i32, %c0_i32_0 : i32, i32
  }
  func.func @transform_3(%arg0: i32) -> (i32, i32) {
    %c0_i32 = arith.constant 0 : i32
    %c0_i32_0 = arith.constant 0 : i32
    %c0_i32_1 = arith.constant 0 : i32
    return %c0_i32, %c0_i32_0 : i32, i32
  }
  func.func @transform_4(%arg0: i32) -> (i32, i32) {
    %c0_i32 = arith.constant 0 : i32
    %c0_i32_0 = arith.constant 0 : i32
    %c0_i32_1 = arith.constant 0 : i32
    return %c0_i32, %c0_i32_0 : i32, i32
  }
  func.func @transform_5(%arg0: i32) -> (i32, i32) {
    %c0_i32 = arith.constant 0 : i32
    %c0_i32_0 = arith.constant 0 : i32
    return %arg0, %c0_i32 : i32, i32
  }
}

</mosaic_0001>

<llo_original>
// kernel: tpu_custom_call.1
$region0: #{tpu_custom_call.1}
  #allocation0 [shape = 'u32[]', space=smem, size = 0x4, offset = 0x4, fixed_abs, tag = 'smem constant byte address 0x4 - core index']
  #allocation1 [shape = 'u32[72,128]{1,0:T(1,128)}', space=vmem, size = 0x9000, scoped, tag = 'internal scratch']
  %s0 = inlined_call_operand.vmem [shape: f32[64,16], index: 0, kind: input, shape index: {}]
  %s1 = inlined_call_operand.vmem [shape: f32[16,128], index: 1, kind: input, shape index: {}]
  %s2 = inlined_call_operand.vmem [shape: f32[1,128], index: 2, kind: input, shape index: {}]
  %s3 = inlined_call_operand.hbm [shape: f32[128,512], index: 3, kind: input, shape index: {}]
  %s4 = inlined_call_operand.vmem [shape: f32[1,512], index: 4, kind: input, shape index: {}]
  %s5 = inlined_call_operand.hbm [shape: f32[64,512], index: 5, kind: output, shape index: {}]
  %s6 = sld [smem:[#allocation0]]
  $region34: #{tpu_custom_call.1} parent=0
    _
  %s8 = ssub.s32 1, %s6
  %s9 = scalar_select 0, %s8, %s6
  $region1: #{tpu_custom_call.1} parent=0
    #allocation2 [shape = 'u8[262144]{0}', space=vmem, size = 0x40000, scoped, tag = 'input window, operand 3, single buffered']
    #allocation3 [shape = 's32[1]{0}', space=sflag, size = 0x4, scoped, tag = 'scoped memory for tpu_custom_call.1']
    #allocation4 [shape = 's32[1]{0}', space=sflag, size = 0x4, scoped, tag = 'scoped memory for tpu_custom_call.1']
    #allocation5 [shape = 'u8[131072]{0}', space=vmem, size = 0x20000, scoped, tag = 'output window, operand 0, single buffered']
    %10 = vsyncpa [#allocation3], 0
    %11 = vsyncpa [#allocation4], 0
    // Predicated region
    $region2: #{tpu_custom_call.1} parent=1 // pred_check
      _
    $region3: #{tpu_custom_call.1} parent=1 // pred_check_branch
      %13 = sbr.rel (0) target = $region5
    $region4: #{tpu_custom_call.1} parent=1 // pred_region
      _
    $region5: #{tpu_custom_call.1} parent=1 // pred_fallthru
      _
    // Predicated region
    $region6: #{tpu_custom_call.1} parent=1 // pred_check
      _
    $region7: #{tpu_custom_call.1} parent=1 // pred_check_branch
      %15 = sbr.rel (0) target = $region9
    $region8: #{tpu_custom_call.1} parent=1 // pred_region
      _
    $region9: #{tpu_custom_call.1} parent=1 // pred_fallthru
      _
    // Predicated region
    $region10: #{tpu_custom_call.1} parent=1 // pred_check
      _
    $region11: #{tpu_custom_call.1} parent=1 // pred_check_branch
      %17 = sbr.rel (0) target = $region13
    $region12: #{tpu_custom_call.1} parent=1 // pred_region
      _
    $region13: #{tpu_custom_call.1} parent=1 // pred_fallthru
      _
    // Predicated region
    $region14: #{tpu_custom_call.1} parent=1 // pred_check
      _
    $region15: #{tpu_custom_call.1} parent=1 // pred_check_branch
      %19 = sbr.rel (0) target = $region17
    $region16: #{tpu_custom_call.1} parent=1 // pred_region
      %21 = vsyncadd [#allocation3], 0
      %s22 = sshll.u32 %s3, 4
      %s23 = int_to_ptr.hbm [resolvable:$true] %s22
      %s24 = sshll.u32 [#allocation2], 4
      %s25 = int_to_ptr.vmem [resolvable:$true] %s24
      %30 = dma.hbm_to_vmem [thread:$0]  %s23, 8192, %s25, [#allocation3], 512, 512, 32
    $region17: #{tpu_custom_call.1} parent=1 // pred_fallthru
      _
    // Predicated region
    $region18: #{tpu_custom_call.1} parent=1 // pred_check
      _
    $region19: #{tpu_custom_call.1} parent=1 // pred_check_branch
      %32 = sbr.rel (0) target = $region21
    $region20: #{tpu_custom_call.1} parent=1 // pred_region
      _
    $region21: #{tpu_custom_call.1} parent=1 // pred_fallthru
      _
    // Predicated region
    $region22: #{tpu_custom_call.1} parent=1 // pred_check
      _
    $region23: #{tpu_custom_call.1} parent=1 // pred_check_branch
      %34 = sbr.rel (0) target = $region25
    $region24: #{tpu_custom_call.1} parent=1 // pred_region
      %36 = dma.done [#allocation3], 8192
    $region25: #{tpu_custom_call.1} parent=1 // pred_fallthru
      _
    %v37 = vld [vmem:[%s0] sm:$0xff]
    %v38 = vld [vmem:[%s0 + $0x8] sm:$0xff]
    %v39 = vld [vmem:[%s0 + $0x10] sm:$0xff]
    %v40 = vld [vmem:[%s0 + $0x18] sm:$0xff]
    %v41 = vld [vmem:[%s0 + $0x20] sm:$0xff]
    %v42 = vld [vmem:[%s0 + $0x28] sm:$0xff]
    %v43 = vld [vmem:[%s0 + $0x30] sm:$0xff]
    %v44 = vld [vmem:[%s0 + $0x38] sm:$0xff]
    %v45 = vld [vmem:[%s1] sm:$0xff]
    %v46 = vld [vmem:[%s1 + $0x8] sm:$0xff]
    %v47 = vld [vmem:[%s2] sm:$0x1]
    %v49 = vperm.slane %v47, 0
    %vm51 = vcmask 130048
    %v53 = vsel %vm51, %v37, 0
    %v56 = vsel %vm51, %v38, 0
    %v59 = vsel %vm51, %v39, 0
    %v62 = vsel %vm51, %v40, 0
    %v65 = vsel %vm51, %v41, 0
    %v68 = vsel %vm51, %v42, 0
    %v71 = vsel %vm51, %v43, 0
    %v74 = vsel %vm51, %v44, 0
    %76 = vmatpush.msra.mxu0 0.0
    %77 = vmatpush.msra.mxu0 0.0
    %78 = vmatpush.msra.mxu0 0.0
    %79 = vmatpush.msra.mxu0 0.0
    %80 = vmatpush.msra.mxu0 0.0
    %81 = vmatpush.msra.mxu0 0.0
    %82 = vmatpush.msra.mxu0 0.0
    %83 = vmatpush.msra.mxu0 0.0
    %84 = vmatpush.msra.mxu0 0.0
    %85 = vmatpush.msra.mxu0 0.0
    %86 = vmatpush.msra.mxu0 0.0
    %87 = vmatpush.msra.mxu0 0.0
    %88 = vmatpush.msra.mxu0 0.0
    %89 = vmatpush.msra.mxu0 0.0
    %90 = vmatpush.msra.mxu0 %v46
    %91 = vmatpush.msra.mxu0 %v45
    %92 = vmatmul.f32.gmra.mxu0 %v53
    %v93 = vpop.f32.mrf.mxu0
    %v94 = vadd.f32 %v49, %v93
    %95 = vmatmul.f32.gmra.mxu0 %v56
    %v96 = vpop.f32.mrf.mxu0
    %v97 = vadd.f32 %v49, %v96
    %98 = vmatmul.f32.gmra.mxu0 %v59
    %v99 = vpop.f32.mrf.mxu0
    %v100 = vadd.f32 %v49, %v99
    %101 = vmatmul.f32.gmra.mxu0 %v62
    %v102 = vpop.f32.mrf.mxu0
    %v103 = vadd.f32 %v49, %v102
    %104 = vmatmul.f32.gmra.mxu0 %v65
    %v105 = vpop.f32.mrf.mxu0
    %v106 = vadd.f32 %v49, %v105
    %107 = vmatmul.f32.gmra.mxu0 %v68
    %v108 = vpop.f32.mrf.mxu0
    %v109 = vadd.f32 %v49, %v108
    %110 = vmatmul.f32.gmra.mxu0 %v71
    %v111 = vpop.f32.mrf.mxu0
    %v112 = vadd.f32 %v49, %v111
    %113 = vmatmul.f32.gmra.mxu0 %v74
    %v114 = vpop.f32.mrf.mxu0
    %v115 = vadd.f32 %v49, %v114
    %116 = vdwg.mxu0
    %v117 = vmax.f32 %v94, 0.0
    %v118 = vmax.f32 %v97, 0.0
    %v119 = vmax.f32 %v100, 0.0
    %v120 = vmax.f32 %v103, 0.0
    %v121 = vmax.f32 %v106, 0.0
    %v122 = vmax.f32 %v109, 0.0
    %v123 = vmax.f32 %v112, 0.0
    %v124 = vmax.f32 %v115, 0.0
    %v125 = vld [vmem:[#allocation2] sm:$0xff]
    %v126 = vld [vmem:[#allocation2 + $0x8] sm:$0xff]
    %v127 = vld [vmem:[#allocation2 + $0x10] sm:$0xff]
    %v128 = vld [vmem:[#allocation2 + $0x18] sm:$0xff]
    %v129 = vld [vmem:[#allocation2 + $0x20] sm:$0xff]
    %v130 = vld [vmem:[#allocation2 + $0x28] sm:$0xff]
    %v131 = vld [vmem:[#allocation2 + $0x30] sm:$0xff]
    %v132 = vld [vmem:[#allocation2 + $0x38] sm:$0xff]
    %v133 = vld [vmem:[#allocation2 + $0x40] sm:$0xff]
    %v134 = vld [vmem:[#allocation2 + $0x48] sm:$0xff]
    %v135 = vld [vmem:[#allocation2 + $0x50] sm:$0xff]
    %v136 = vld [vmem:[#allocation2 + $0x58] sm:$0xff]
    %v137 = vld [vmem:[#allocation2 + $0x60] sm:$0xff]
    %v138 = vld [vmem:[#allocation2 + $0x68] sm:$0xff]
    %v139 = vld [vmem:[#allocation2 + $0x70] sm:$0xff]
    %v140 = vld [vmem:[#allocation2 + $0x78] sm:$0xff]
    %v141 = vld [vmem:[#allocation2 + $0x80] sm:$0xff]
    %v142 = vld [vmem:[#allocation2 + $0x88] sm:$0xff]
    %v143 = vld [vmem:[#allocation2 + $0x90] sm:$0xff]
    %v144 = vld [vmem:[#allocation2 + $0x98] sm:$0xff]
    %v145 = vld [vmem:[#allocation2 + $0xa0] sm:$0xff]
    %v146 = vld [vmem:[#allocation2 + $0xa8] sm:$0xff]
    %v147 = vld [vmem:[#allocation2 + $0xb0] sm:$0xff]
    %v148 = vld [vmem:[#allocation2 + $0xb8] sm:$0xff]
    %v149 = vld [vmem:[#allocation2 + $0xc0] sm:$0xff]
    %v150 = vld [vmem:[#allocation2 + $0xc8] sm:$0xff]
    %v151 = vld [vmem:[#allocation2 + $0xd0] sm:$0xff]
    %v152 = vld [vmem:[#allocation2 + $0xd8] sm:$0xff]
    %v153 = vld [vmem:[#allocation2 + $0xe0] sm:$0xff]
    %v154 = vld [vmem:[#allocation2 + $0xe8] sm:$0xff]
    %v155 = vld [vmem:[#allocation2 + $0xf0] sm:$0xff]
    %v156 = vld [vmem:[#allocation2 + $0xf8] sm:$0xff]
    %v157 = vld [vmem:[#allocation2 + $0x100] sm:$0xff]
    %v158 = vld [vmem:[#allocation2 + $0x108] sm:$0xff]
    %v159 = vld [vmem:[#allocation2 + $0x110] sm:$0xff]
    %v160 = vld [vmem:[#allocation2 + $0x118] sm:$0xff]
    %v161 = vld [vmem:[#allocation2 + $0x120] sm:$0xff]
    %v162 = vld [vmem:[#allocation2 + $0x128] sm:$0xff]
    %v163 = vld [vmem:[#allocation2 + $0x130] sm:$0xff]
    %v164 = vld [vmem:[#allocation2 + $0x138] sm:$0xff]
    %v165 = vld [vmem:[#allocation2 + $0x140] sm:$0xff]
    %v166 = vld [vmem:[#allocation2 + $0x148] sm:$0xff]
    %v167 = vld [vmem:[#allocation2 + $0x150] sm:$0xff]
    %v168 = vld [vmem:[#allocation2 + $0x158] sm:$0xff]
    %v169 = vld [vmem:[#allocation2 + $0x160] sm:$0xff]
    %v170 = vld [vmem:[#allocation2 + $0x168] sm:$0xff]
    %v171 = vld [vmem:[#allocation2 + $0x170] sm:$0xff]
    %v172 = vld [vmem:[#allocation2 + $0x178] sm:$0xff]
    %v173 = vld [vmem:[#allocation2 + $0x180] sm:$0xff]
    %v174 = vld [vmem:[#allocation2 + $0x188] sm:$0xff]
    %v175 = vld [vmem:[#allocation2 + $0x190] sm:$0xff]
    %v176 = vld [vmem:[#allocation2 + $0x198] sm:$0xff]
    %v177 = vld [vmem:[#allocation2 + $0x1a0] sm:$0xff]
    %v178 = vld [vmem:[#allocation2 + $0x1a8] sm:$0xff]
    %v179 = vld [vmem:[#allocation2 + $0x1b0] sm:$0xff]
    %v180 = vld [vmem:[#allocation2 + $0x1b8] sm:$0xff]
    %v181 = vld [vmem:[#allocation2 + $0x1c0] sm:$0xff]
    %v182 = vld [vmem:[#allocation2 + $0x1c8] sm:$0xff]
    %v183 = vld [vmem:[#allocation2 + $0x1d0] sm:$0xff]
    %v184 = vld [vmem:[#allocation2 + $0x1d8] sm:$0xff]
    %v185 = vld [vmem:[#allocation2 + $0x1e0] sm:$0xff]
    %v186 = vld [vmem:[#allocation2 + $0x1e8] sm:$0xff]
    %v187 = vld [vmem:[#allocation2 + $0x1f0] sm:$0xff]
    %v188 = vld [vmem:[#allocation2 + $0x1f8] sm:$0xff]
    %v189 = vld [vmem:[%s4] sm:$0xf]
    %v191 = vperm.slane %v189, 0
    %v192 = vperm.slane %v189, 1
    %v193 = vperm.slane %v189, 2
    %v194 = vperm.slane %v189, 3
    %199 = vmatpush.msra.mxu0 %v185
    %200 = vmatpush.msra.mxu0 %v181
    %201 = vmatpush.msra.mxu0 %v177
    %202 = vmatpush.msra.mxu0 %v173
    %203 = vmatpush.msra.mxu0 %v169
    %204 = vmatpush.msra.mxu0 %v165
    %205 = vmatpush.msra.mxu0 %v161
    %206 = vmatpush.msra.mxu0 %v157
    %207 = vmatpush.msra.mxu0 %v153
    %208 = vmatpush.msra.mxu0 %v149
    %209 = vmatpush.msra.mxu0 %v145
    %210 = vmatpush.msra.mxu0 %v141
    %211 = vmatpush.msra.mxu0 %v137
    %212 = vmatpush.msra.mxu0 %v133
    %213 = vmatpush.msra.mxu0 %v129
    %214 = vmatpush.msra.mxu0 %v125
    %215 = vmatmul.f32.gmra.mxu0 %v117
    %v216 = vpop.f32.mrf.mxu0
    %v217 = vadd.f32 %v191, %v216
    %218 = vmatmul.f32.gmra.mxu0 %v118
    %v219 = vpop.f32.mrf.mxu0
    %v220 = vadd.f32 %v191, %v219
    %221 = vmatmul.f32.gmra.mxu0 %v119
    %v222 = vpop.f32.mrf.mxu0
    %v223 = vadd.f32 %v191, %v222
    %224 = vmatmul.f32.gmra.mxu0 %v120
    %v225 = vpop.f32.mrf.mxu0
    %v226 = vadd.f32 %v191, %v225
    %227 = vmatmul.f32.gmra.mxu0 %v121
    %v228 = vpop.f32.mrf.mxu0
    %v229 = vadd.f32 %v191, %v228
    %230 = vmatmul.f32.gmra.mxu0 %v122
    %v231 = vpop.f32.mrf.mxu0
    %v232 = vadd.f32 %v191, %v231
    %233 = vmatmul.f32.gmra.mxu0 %v123
    %v234 = vpop.f32.mrf.mxu0
    %v235 = vadd.f32 %v191, %v234
    %236 = vmatmul.f32.gmra.mxu0 %v124
    %v237 = vpop.f32.mrf.mxu0
    %v238 = vadd.f32 %v191, %v237
    %239 = vdwg.mxu0
    %240 = vmatpush.msra.mxu0 %v186
    %241 = vmatpush.msra.mxu0 %v182
    %242 = vmatpush.msra.mxu0 %v178
    %243 = vmatpush.msra.mxu0 %v174
    %244 = vmatpush.msra.mxu0 %v170
    %245 = vmatpush.msra.mxu0 %v166
    %246 = vmatpush.msra.mxu0 %v162
    %247 = vmatpush.msra.mxu0 %v158
    %248 = vmatpush.msra.mxu0 %v154
    %249 = vmatpush.msra.mxu0 %v150
    %250 = vmatpush.msra.mxu0 %v146
    %251 = vmatpush.msra.mxu0 %v142
    %252 = vmatpush.msra.mxu0 %v138
    %253 = vmatpush.msra.mxu0 %v134
    %254 = vmatpush.msra.mxu0 %v130
    %255 = vmatpush.msra.mxu0 %v126
    %256 = vmatmul.f32.gmra.mxu0 %v117
    %v257 = vpop.f32.mrf.mxu0
    %v258 = vadd.f32 %v192, %v257
    %259 = vmatmul.f32.gmra.mxu0 %v118
    %v260 = vpop.f32.mrf.mxu0
    %v261 = vadd.f32 %v192, %v260
    %262 = vmatmul.f32.gmra.mxu0 %v119
    %v263 = vpop.f32.mrf.mxu0
    %v264 = vadd.f32 %v192, %v263
    %265 = vmatmul.f32.gmra.mxu0 %v120
    %v266 = vpop.f32.mrf.mxu0
    %v267 = vadd.f32 %v192, %v266
    %268 = vmatmul.f32.gmra.mxu0 %v121
    %v269 = vpop.f32.mrf.mxu0
    %v270 = vadd.f32 %v192, %v269
    %271 = vmatmul.f32.gmra.mxu0 %v122
    %v272 = vpop.f32.mrf.mxu0
    %v273 = vadd.f32 %v192, %v272
    %274 = vmatmul.f32.gmra.mxu0 %v123
    %v275 = vpop.f32.mrf.mxu0
    %v276 = vadd.f32 %v192, %v275
    %277 = vmatmul.f32.gmra.mxu0 %v124
    %v278 = vpop.f32.mrf.mxu0
    %v279 = vadd.f32 %v192, %v278
    %280 = vdwg.mxu0
    %281 = vmatpush.msra.mxu0 %v187
    %282 = vmatpush.msra.mxu0 %v183
    %283 = vmatpush.msra.mxu0 %v179
    %284 = vmatpush.msra.mxu0 %v175
    %285 = vmatpush.msra.mxu0 %v171
    %286 = vmatpush.msra.mxu0 %v167
    %287 = vmatpush.msra.mxu0 %v163
    %288 = vmatpush.msra.mxu0 %v159
    %289 = vmatpush.msra.mxu0 %v155
    %290 = vmatpush.msra.mxu0 %v151
    %291 = vmatpush.msra.mxu0 %v147
    %292 = vmatpush.msra.mxu0 %v143
    %293 = vmatpush.msra.mxu0 %v139
    %294 = vmatpush.msra.mxu0 %v135
    %295 = vmatpush.msra.mxu0 %v131
    %296 = vmatpush.msra.mxu0 %v127
    %297 = vmatmul.f32.gmra.mxu0 %v117
    %v298 = vpop.f32.mrf.mxu0
    %v299 = vadd.f32 %v193, %v298
    %300 = vmatmul.f32.gmra.mxu0 %v118
    %v301 = vpop.f32.mrf.mxu0
    %v302 = vadd.f32 %v193, %v301
    %303 = vmatmul.f32.gmra.mxu0 %v119
    %v304 = vpop.f32.mrf.mxu0
    %v305 = vadd.f32 %v193, %v304
    %306 = vmatmul.f32.gmra.mxu0 %v120
    %v307 = vpop.f32.mrf.mxu0
    %v308 = vadd.f32 %v193, %v307
    %309 = vmatmul.f32.gmra.mxu0 %v121
    %v310 = vpop.f32.mrf.mxu0
    %v311 = vadd.f32 %v193, %v310
    %312 = vmatmul.f32.gmra.mxu0 %v122
    %v313 = vpop.f32.mrf.mxu0
    %v314 = vadd.f32 %v193, %v313
    %315 = vmatmul.f32.gmra.mxu0 %v123
    %v316 = vpop.f32.mrf.mxu0
    %v317 = vadd.f32 %v193, %v316
    %318 = vmatmul.f32.gmra.mxu0 %v124
    %v319 = vpop.f32.mrf.mxu0
    %v320 = vadd.f32 %v193, %v319
    %321 = vdwg.mxu0
    %322 = vmatpush.msra.mxu0 %v188
    %323 = vmatpush.msra.mxu0 %v184
    %324 = vmatpush.msra.mxu0 %v180
    %325 = vmatpush.msra.mxu0 %v176
    %326 = vmatpush.msra.mxu0 %v172
    %327 = vmatpush.msra.mxu0 %v168
    %328 = vmatpush.msra.mxu0 %v164
    %329 = vmatpush.msra.mxu0 %v160
    %330 = vmatpush.msra.mxu0 %v156
    %331 = vmatpush.msra.mxu0 %v152
    %332 = vmatpush.msra.mxu0 %v148
    %333 = vmatpush.msra.mxu0 %v144
    %334 = vmatpush.msra.mxu0 %v140
    %335 = vmatpush.msra.mxu0 %v136
    %336 = vmatpush.msra.mxu0 %v132
    %337 = vmatpush.msra.mxu0 %v128
    %338 = vmatmul.f32.gmra.mxu0 %v117
    %v339 = vpop.f32.mrf.mxu0
    %v340 = vadd.f32 %v194, %v339
    %341 = vmatmul.f32.gmra.mxu0 %v118
    %v342 = vpop.f32.mrf.mxu0
    %v343 = vadd.f32 %v194, %v342
    %344 = vmatmul.f32.gmra.mxu0 %v119
    %v345 = vpop.f32.mrf.mxu0
    %v346 = vadd.f32 %v194, %v345
    %347 = vmatmul.f32.gmra.mxu0 %v120
    %v348 = vpop.f32.mrf.mxu0
    %v349 = vadd.f32 %v194, %v348
    %350 = vmatmul.f32.gmra.mxu0 %v121
    %v351 = vpop.f32.mrf.mxu0
    %v352 = vadd.f32 %v194, %v351
    %353 = vmatmul.f32.gmra.mxu0 %v122
    %v354 = vpop.f32.mrf.mxu0
    %v355 = vadd.f32 %v194, %v354
    %356 = vmatmul.f32.gmra.mxu0 %v123
    %v357 = vpop.f32.mrf.mxu0
    %v358 = vadd.f32 %v194, %v357
    %359 = vmatmul.f32.gmra.mxu0 %v124
    %v360 = vpop.f32.mrf.mxu0
    %v361 = vadd.f32 %v194, %v360
    %362 = vdwg.mxu0
    %v363 = vmax.f32 %v217, 0.0
    %v364 = vmax.f32 %v258, 0.0
    %v365 = vmax.f32 %v299, 0.0
    %v366 = vmax.f32 %v340, 0.0
    %v367 = vmax.f32 %v220, 0.0
    %v368 = vmax.f32 %v261, 0.0
    %v369 = vmax.f32 %v302, 0.0
    %v370 = vmax.f32 %v343, 0.0
    %v371 = vmax.f32 %v223, 0.0
    %v372 = vmax.f32 %v264, 0.0
    %v373 = vmax.f32 %v305, 0.0
    %v374 = vmax.f32 %v346, 0.0
    %v375 = vmax.f32 %v226, 0.0
    %v376 = vmax.f32 %v267, 0.0
    %v377 = vmax.f32 %v308, 0.0
    %v378 = vmax.f32 %v349, 0.0
    %v379 = vmax.f32 %v229, 0.0
    %v380 = vmax.f32 %v270, 0.0
    %v381 = vmax.f32 %v311, 0.0
    %v382 = vmax.f32 %v352, 0.0
    %v383 = vmax.f32 %v232, 0.0
    %v384 = vmax.f32 %v273, 0.0
    %v385 = vmax.f32 %v314, 0.0
    %v386 = vmax.f32 %v355, 0.0
    %v387 = vmax.f32 %v235, 0.0
    %v388 = vmax.f32 %v276, 0.0
    %v389 = vmax.f32 %v317, 0.0
    %v390 = vmax.f32 %v358, 0.0
    %v391 = vmax.f32 %v238, 0.0
    %v392 = vmax.f32 %v279, 0.0
    %v393 = vmax.f32 %v320, 0.0
    %v394 = vmax.f32 %v361, 0.0
    %395 = vst [vmem:[#allocation5] sm:$0xff] %v363
    %396 = vst [vmem:[#allocation5 + $0x8] sm:$0xff] %v364
    %397 = vst [vmem:[#allocation5 + $0x10] sm:$0xff] %v365
    %398 = vst [vmem:[#allocation5 + $0x18] sm:$0xff] %v366
    %399 = vst [vmem:[#allocation5 + $0x20] sm:$0xff] %v367
    %400 = vst [vmem:[#allocation5 + $0x28] sm:$0xff] %v368
    %401 = vst [vmem:[#allocation5 + $0x30] sm:$0xff] %v369
    %402 = vst [vmem:[#allocation5 + $0x38] sm:$0xff] %v370
    %403 = vst [vmem:[#allocation5 + $0x40] sm:$0xff] %v371
    %404 = vst [vmem:[#allocation5 + $0x48] sm:$0xff] %v372
    %405 = vst [vmem:[#allocation5 + $0x50] sm:$0xff] %v373
    %406 = vst [vmem:[#allocation5 + $0x58] sm:$0xff] %v374
    %407 = vst [vmem:[#allocation5 + $0x60] sm:$0xff] %v375
    %408 = vst [vmem:[#allocation5 + $0x68] sm:$0xff] %v376
    %409 = vst [vmem:[#allocation5 + $0x70] sm:$0xff] %v377
    %410 = vst [vmem:[#allocation5 + $0x78] sm:$0xff] %v378
    %411 = vst [vmem:[#allocation5 + $0x80] sm:$0xff] %v379
    %412 = vst [vmem:[#allocation5 + $0x88] sm:$0xff] %v380
    %413 = vst [vmem:[#allocation5 + $0x90] sm:$0xff] %v381
    %414 = vst [vmem:[#allocation5 + $0x98] sm:$0xff] %v382
    %415 = vst [vmem:[#allocation5 + $0xa0] sm:$0xff] %v383
    %416 = vst [vmem:[#allocation5 + $0xa8] sm:$0xff] %v384
    %417 = vst [vmem:[#allocation5 + $0xb0] sm:$0xff] %v385
    %418 = vst [vmem:[#allocation5 + $0xb8] sm:$0xff] %v386
    %419 = vst [vmem:[#allocation5 + $0xc0] sm:$0xff] %v387
    %420 = vst [vmem:[#allocation5 + $0xc8] sm:$0xff] %v388
    %421 = vst [vmem:[#allocation5 + $0xd0] sm:$0xff] %v389
    %422 = vst [vmem:[#allocation5 + $0xd8] sm:$0xff] %v390
    %423 = vst [vmem:[#allocation5 + $0xe0] sm:$0xff] %v391
    %424 = vst [vmem:[#allocation5 + $0xe8] sm:$0xff] %v392
    %425 = vst [vmem:[#allocation5 + $0xf0] sm:$0xff] %v393
    %426 = vst [vmem:[#allocation5 + $0xf8] sm:$0xff] %v394
    // Predicated region
    $region26: #{tpu_custom_call.1} parent=1 // pred_check
      _
    $region27: #{tpu_custom_call.1} parent=1 // pred_check_branch
      %428 = sbr.rel (0) target = $region29
    $region28: #{tpu_custom_call.1} parent=1 // pred_region
      %430 = vsyncadd [#allocation4], 0
      %s431 = sshll.u32 [#allocation5], 4
      %s432 = int_to_ptr.vmem [resolvable:$true] %s431
      %s433 = sshll.u32 %s5, 4
      %s434 = int_to_ptr.hbm [resolvable:$true] %s433
      %439 = dma.vmem_to_hbm [thread:$0]  %s432, 4096, %s434, [#allocation4], 512, 512, 32
    $region29: #{tpu_custom_call.1} parent=1 // pred_fallthru
      _
    // Predicated region
    $region30: #{tpu_custom_call.1} parent=1 // pred_check
      _
    $region31: #{tpu_custom_call.1} parent=1 // pred_check_branch
      %441 = sbr.rel (0) target = $region33
    $region32: #{tpu_custom_call.1} parent=1 // pred_region
      %443 = dma.done [#allocation4], 4096
    $region33: #{tpu_custom_call.1} parent=1 // pred_fallthru
      _
    %444 = vsyncpa [#allocation3], 1
    %445 = vsyncpa [#allocation4], 1

</llo_original>
